<compile_context>
chip_gen: v5e
topology: v5e:2x2
jax: 0.10.0
libtpu: 0.0.40
codegen_flags: <defaults>
</compile_context>

<pallas_src>
import functools

import jax
import jax.numpy as jnp
from jax.experimental import pallas as pl
from jax.experimental.pallas import tpu as pltpu

HIDDEN = 256      # hidden width of every fc layer
HEAD_PAD = 128    # lane-dense packed-output width (value @ col 0, mean @ cols 1..1+A)


def _round_up(n, m):
    return ((n + m - 1) // m) * m


def _mlp_net_kernel(
    x_ref,
    w1_ref, b1_ref,                       # fused layer 1: (S, 2*HIDDEN), (1, 2*HIDDEN)
    w2v_ref, b2v_ref, w3v_ref, b3v_ref,   # value branch layers 2/3
    w2a_ref, b2a_ref, w3a_ref, b3a_ref,   # action branch layers 2/3
    whv_ref, wha_ref, bh_ref,             # zero-padded heads: (HIDDEN,128),(HIDDEN,128),(1,128)
    out_ref,                              # packed (TB, 128) f32 output slab
):
    x = x_ref[...]

    def lin_relu(h, w_ref, b_ref):
        y = jnp.dot(h, w_ref[...], preferred_element_type=jnp.float32) + b_ref[...]
        # cast back to the matmul input dtype (no-op in f32 mode, bf16 in bf16 mode)
        return jnp.maximum(y, 0.0).astype(w_ref.dtype)

    # ---- fused layer 1 (one K=S MXU push for both branches) ----
    h1 = lin_relu(x, w1_ref, b1_ref)              # (TB, 2*HIDDEN)
    hv = h1[:, :HIDDEN]
    ha = h1[:, HIDDEN:]

    # ---- value branch ----
    hv = lin_relu(hv, w2v_ref, b2v_ref)
    hv = lin_relu(hv, w3v_ref, b3v_ref)

    # ---- action branch ----
    ha = lin_relu(ha, w2a_ref, b2a_ref)
    ha = lin_relu(ha, w3a_ref, b3a_ref)

    # ---- packed lane-dense heads: out[:, 0] = value, out[:, 1:1+A] = mean ----
    head = (
        jnp.dot(hv, whv_ref[...], preferred_element_type=jnp.float32)
        + jnp.dot(ha, wha_ref[...], preferred_element_type=jnp.float32)
        + bh_ref[...]
    )
    out_ref[...] = head.astype(out_ref.dtype)


@functools.partial(jax.jit, static_argnames=("tb", "use_bf16"))
def mlp_net_forward(x, params, *, tb=512, use_bf16=False):
    """x: (B, state_size) f32. params: dict of (in, out) weights / (1, out) biases."""
    B, S = x.shape
    A = params["wm"].shape[1]
    assert 1 + A <= HEAD_PAD, "num_actions must fit in the packed 128-lane output"

    # ---- parameter prep (wrapper-side layout plumbing) ----
    w1 = jnp.concatenate([params["w1v"], params["w1a"]], axis=1)          # (S, 512)
    b1 = jnp.concatenate([params["b1v"], params["b1a"]], axis=1)          # (1, 512)

    whv = jnp.zeros((HIDDEN, HEAD_PAD), jnp.float32).at[:, 0:1].set(params["wv"])
    wha = jnp.zeros((HIDDEN, HEAD_PAD), jnp.float32).at[:, 1:1 + A].set(params["wm"])
    bh = jnp.zeros((1, HEAD_PAD), jnp.float32)
    bh = bh.at[:, 0:1].set(params["bv"]).at[:, 1:1 + A].set(params["bm"])

    mx_dtype = jnp.bfloat16 if use_bf16 else jnp.float32
    mats = {
        "w1": w1.astype(mx_dtype),
        "w2v": params["w2v"].astype(mx_dtype), "w3v": params["w3v"].astype(mx_dtype),
        "w2a": params["w2a"].astype(mx_dtype), "w3a": params["w3a"].astype(mx_dtype),
        "whv": whv.astype(mx_dtype), "wha": wha.astype(mx_dtype),
    }
    x_mx = x.astype(mx_dtype)

    # ---- batch tiling: pad B to a multiple of the batch tile ----
    TB = min(tb, _round_up(B, 8))          # keep sublane-aligned; one tile for tiny B
    B_pad = _round_up(B, TB)
    if B_pad != B:
        x_mx = jnp.pad(x_mx, ((0, B_pad - B), (0, 0)))
    grid = (B_pad // TB,)

    def batch_spec(cols):
        return pl.BlockSpec((TB, cols), lambda i: (i, 0))

    def resident_spec(arr):
        # full array as one block, constant index_map -> weights stay in VMEM
        return pl.BlockSpec(arr.shape, lambda i: (0, 0))

    inputs = (
        x_mx,
        mats["w1"], b1,
        mats["w2v"], params["b2v"], mats["w3v"], params["b3v"],
        mats["w2a"], params["b2a"], mats["w3a"], params["b3a"],
        mats["whv"], mats["wha"], bh,
    )
    in_specs = [batch_spec(S)] + [resident_spec(a) for a in inputs[1:]]

    weight_bytes = sum(a.size * a.dtype.itemsize for a in inputs[1:])
    flops = 2 * B_pad * (S * 2 * HIDDEN + 2 * 2 * HIDDEN * HIDDEN + 2 * HIDDEN * HEAD_PAD)
    cost = pl.CostEstimate(
        flops=flops,
        transcendentals=0,
        bytes_accessed=weight_bytes + B_pad * (S + HEAD_PAD) * 4,
    )

    packed = pl.pallas_call(
        _mlp_net_kernel,
        out_shape=jax.ShapeDtypeStruct((B_pad, HEAD_PAD), jnp.float32),
        grid=grid,
        in_specs=in_specs,
        out_specs=batch_spec(HEAD_PAD),
        compiler_params=pltpu.CompilerParams(dimension_semantics=("parallel",)),
        cost_estimate=cost,
    )(*inputs)

    value = packed[:B, 0:1]
    mean = packed[:B, 1:1 + A]
    # sigma is batch-independent: compute exp once in the wrapper and broadcast.
    sigma = jnp.broadcast_to(jnp.exp(params["sigma_log"]), (B, A))
    return value, (mean, sigma)


def init_params(key, state_size, num_actions):
    """Deterministic synthetic init mirroring the PyTorch module's shapes.

    All Linear weights are stored transposed as (in, out); biases as (1, out).
    action_mean / value: weight scaled by 0.1, bias zeroed.  sigma_log: zeros.
    """
    ks = jax.random.split(key, 16)

    def linear(kw, kb, fan_in, fan_out, w_scale=1.0, zero_bias=False):
        bound = 1.0 / jnp.sqrt(jnp.float32(fan_in))
        w = jax.random.uniform(kw, (fan_in, fan_out), jnp.float32, -bound, bound)
        w = w * w_scale
        if zero_bias:
            b = jnp.zeros((1, fan_out), jnp.float32)
        else:
            b = jax.random.uniform(kb, (1, fan_out), jnp.float32, -bound, bound)
        return w, b

    p = {}
    p["w1v"], p["b1v"] = linear(ks[0], ks[1], state_size, HIDDEN)
    p["w2v"], p["b2v"] = linear(ks[2], ks[3], HIDDEN, HIDDEN)
    p["w3v"], p["b3v"] = linear(ks[4], ks[5], HIDDEN, HIDDEN)
    p["w1a"], p["b1a"] = linear(ks[6], ks[7], state_size, HIDDEN)
    p["w2a"], p["b2a"] = linear(ks[8], ks[9], HIDDEN, HIDDEN)
    p["w3a"], p["b3a"] = linear(ks[10], ks[11], HIDDEN, HIDDEN)
    p["wv"], p["bv"] = linear(ks[12], ks[13], HIDDEN, 1, w_scale=0.1, zero_bias=True)
    p["wm"], p["bm"] = linear(ks[14], ks[15], HIDDEN, num_actions, w_scale=0.1,
                              zero_bias=True)
    p["sigma_log"] = jnp.zeros((1, num_actions), jnp.float32)
    return p


def _reference_forward(x, p):
    """Pure-JAX reference mirroring the PyTorch forward."""
    def lin_relu(h, w, b):
        return jnp.maximum(h @ w + b, 0.0)

    hv = lin_relu(x, p["w1v"], p["b1v"])
    hv = lin_relu(hv, p["w2v"], p["b2v"])
    hv = lin_relu(hv, p["w3v"], p["b3v"])
    value = hv @ p["wv"] + p["bv"]

    ha = lin_relu(x, p["w1a"], p["b1a"])
    ha = lin_relu(ha, p["w2a"], p["b2a"])
    ha = lin_relu(ha, p["w3a"], p["b3a"])
    mean = ha @ p["wm"] + p["bm"]
    sigma = jnp.broadcast_to(jnp.exp(p["sigma_log"]), mean.shape)
    return value, (mean, sigma)


if __name__ == "__main__":
    STATE_SIZE = 8
    NUM_ACTIONS = 4
    BATCH = 2

    key = jax.random.PRNGKey(0)
    k_params, k_x = jax.random.split(key)

    params = init_params(k_params, STATE_SIZE, NUM_ACTIONS)
    x = jax.random.normal(k_x, (BATCH, STATE_SIZE), jnp.float32)

    value, (mean, sigma) = mlp_net_forward(x, params)
    jax.block_until_ready((value, mean, sigma))

    # correctness check against pure-JAX reference (f32 path)
    v_ref, (m_ref, s_ref) = _reference_forward(x, params)
    assert value.shape == (BATCH, 1)
    assert mean.shape == (BATCH, NUM_ACTIONS)
    assert sigma.shape == (BATCH, NUM_ACTIONS)
    assert jnp.allclose(value, v_ref, atol=1e-5, rtol=1e-5)
    assert jnp.allclose(mean, m_ref, atol=1e-5, rtol=1e-5)
    assert jnp.allclose(sigma, s_ref, atol=1e-5, rtol=1e-5)

    print("KERNEL_OK")
</pallas_src>

<mosaic_0001>
module attributes {stable_mosaic.version = 11 : i64} {
  func.func @_mlp_net_kernel(%arg0: i32, %arg1: memref<8x8xf32, #tpu.memory_space<vmem>>, %arg2: memref<8x512xf32, #tpu.memory_space<vmem>>, %arg3: memref<1x512xf32, #tpu.memory_space<vmem>>, %arg4: memref<256x256xf32, #tpu.memory_space<vmem>>, %arg5: memref<1x256xf32, #tpu.memory_space<vmem>>, %arg6: memref<256x256xf32, #tpu.memory_space<vmem>>, %arg7: memref<1x256xf32, #tpu.memory_space<vmem>>, %arg8: memref<256x256xf32, #tpu.memory_space<vmem>>, %arg9: memref<1x256xf32, #tpu.memory_space<vmem>>, %arg10: memref<256x256xf32, #tpu.memory_space<vmem>>, %arg11: memref<1x256xf32, #tpu.memory_space<vmem>>, %arg12: memref<256x128xf32, #tpu.memory_space<vmem>>, %arg13: memref<256x128xf32, #tpu.memory_space<vmem>>, %arg14: memref<1x128xf32, #tpu.memory_space<vmem>>, %arg15: memref<8x128xf32, #tpu.memory_space<vmem>>) attributes {dimension_semantics = [#tpu.dimension_semantics<parallel>], iteration_bounds = array<i64: 1>, scalar_prefetch = 0 : i64, scratch_operands = 0 : i64, tpu.core_type = #tpu.core_type<tc>, window_params = [{transform_indices = @transform_0, window_bounds = array<i64: 8, 8>}, {pipeline_mode = #tpu.pipeline_mode<synchronous>, transform_indices = @transform_1, window_bounds = array<i64: 8, 512>}, {pipeline_mode = #tpu.pipeline_mode<synchronous>, transform_indices = @transform_2, window_bounds = array<i64: 1, 512>}, {pipeline_mode = #tpu.pipeline_mode<synchronous>, transform_indices = @transform_3, window_bounds = array<i64: 256, 256>}, {pipeline_mode = #tpu.pipeline_mode<synchronous>, transform_indices = @transform_4, window_bounds = array<i64: 1, 256>}, {pipeline_mode = #tpu.pipeline_mode<synchronous>, transform_indices = @transform_5, window_bounds = array<i64: 256, 256>}, {pipeline_mode = #tpu.pipeline_mode<synchronous>, transform_indices = @transform_6, window_bounds = array<i64: 1, 256>}, {pipeline_mode = #tpu.pipeline_mode<synchronous>, transform_indices = @transform_7, window_bounds = array<i64: 256, 256>}, {pipeline_mode = #tpu.pipeline_mode<synchronous>, transform_indices = @transform_8, window_bounds = array<i64: 1, 256>}, {pipeline_mode = #tpu.pipeline_mode<synchronous>, transform_indices = @transform_9, window_bounds = array<i64: 256, 256>}, {pipeline_mode = #tpu.pipeline_mode<synchronous>, transform_indices = @transform_10, window_bounds = array<i64: 1, 256>}, {pipeline_mode = #tpu.pipeline_mode<synchronous>, transform_indices = @transform_11, window_bounds = array<i64: 256, 128>}, {pipeline_mode = #tpu.pipeline_mode<synchronous>, transform_indices = @transform_12, window_bounds = array<i64: 256, 128>}, {pipeline_mode = #tpu.pipeline_mode<synchronous>, transform_indices = @transform_13, window_bounds = array<i64: 1, 128>}, {transform_indices = @transform_14, window_bounds = array<i64: 8, 128>}]} {
    %c0 = arith.constant 0 : index
    %c0_0 = arith.constant 0 : index
    %0 = vector.load %arg1[%c0, %c0_0] : memref<8x8xf32, #tpu.memory_space<vmem>>, vector<8x8xf32>
    %c0_1 = arith.constant 0 : index
    %c0_2 = arith.constant 0 : index
    %1 = vector.load %arg2[%c0_1, %c0_2] : memref<8x512xf32, #tpu.memory_space<vmem>>, vector<8x512xf32>
    %cst = arith.constant dense<0.000000e+00> : vector<8x512xf32>
    %2 = tpu.matmul %0, %1, %cst {dimension_numbers = #tpu.dot_dimension_numbers<[1], [0], [0], [1], [0, 0, 1, 1], [], []>} : vector<8x8xf32>, vector<8x512xf32>, vector<8x512xf32> -> vector<8x512xf32>
    %c0_3 = arith.constant 0 : index
    %c0_4 = arith.constant 0 : index
    %3 = vector.load %arg3[%c0_3, %c0_4] : memref<1x512xf32, #tpu.memory_space<vmem>>, vector<1x512xf32>
    %4 = vector.broadcast %3 : vector<1x512xf32> to vector<8x512xf32>
    %5 = arith.addf %2, %4 : vector<8x512xf32>
    %cst_5 = arith.constant 0.000000e+00 : f32
    %6 = vector.broadcast %cst_5 : f32 to vector<8x512xf32>
    %7 = arith.maximumf %5, %6 : vector<8x512xf32>
    %8 = vector.extract_strided_slice %7 {offsets = [0, 0], sizes = [8, 256], strides = [1, 1]} : vector<8x512xf32> to vector<8x256xf32>
    %9 = vector.extract_strided_slice %7 {offsets = [0, 256], sizes = [8, 256], strides = [1, 1]} : vector<8x512xf32> to vector<8x256xf32>
    %c0_6 = arith.constant 0 : index
    %c0_7 = arith.constant 0 : index
    %10 = vector.load %arg4[%c0_6, %c0_7] : memref<256x256xf32, #tpu.memory_space<vmem>>, vector<256x256xf32>
    %cst_8 = arith.constant dense<0.000000e+00> : vector<8x256xf32>
    %11 = tpu.matmul %8, %10, %cst_8 {dimension_numbers = #tpu.dot_dimension_numbers<[1], [0], [0], [1], [0, 0, 1, 1], [], []>} : vector<8x256xf32>, vector<256x256xf32>, vector<8x256xf32> -> vector<8x256xf32>
    %c0_9 = arith.constant 0 : index
    %c0_10 = arith.constant 0 : index
    %12 = vector.load %arg5[%c0_9, %c0_10] : memref<1x256xf32, #tpu.memory_space<vmem>>, vector<1x256xf32>
    %13 = vector.broadcast %12 : vector<1x256xf32> to vector<8x256xf32>
    %14 = arith.addf %11, %13 : vector<8x256xf32>
    %cst_11 = arith.constant 0.000000e+00 : f32
    %15 = vector.broadcast %cst_11 : f32 to vector<8x256xf32>
    %16 = arith.maximumf %14, %15 : vector<8x256xf32>
    %c0_12 = arith.constant 0 : index
    %c0_13 = arith.constant 0 : index
    %17 = vector.load %arg6[%c0_12, %c0_13] : memref<256x256xf32, #tpu.memory_space<vmem>>, vector<256x256xf32>
    %cst_14 = arith.constant dense<0.000000e+00> : vector<8x256xf32>
    %18 = tpu.matmul %16, %17, %cst_14 {dimension_numbers = #tpu.dot_dimension_numbers<[1], [0], [0], [1], [0, 0, 1, 1], [], []>} : vector<8x256xf32>, vector<256x256xf32>, vector<8x256xf32> -> vector<8x256xf32>
    %c0_15 = arith.constant 0 : index
    %c0_16 = arith.constant 0 : index
    %19 = vector.load %arg7[%c0_15, %c0_16] : memref<1x256xf32, #tpu.memory_space<vmem>>, vector<1x256xf32>
    %20 = vector.broadcast %19 : vector<1x256xf32> to vector<8x256xf32>
    %21 = arith.addf %18, %20 : vector<8x256xf32>
    %cst_17 = arith.constant 0.000000e+00 : f32
    %22 = vector.broadcast %cst_17 : f32 to vector<8x256xf32>
    %23 = arith.maximumf %21, %22 : vector<8x256xf32>
    %c0_18 = arith.constant 0 : index
    %c0_19 = arith.constant 0 : index
    %24 = vector.load %arg8[%c0_18, %c0_19] : memref<256x256xf32, #tpu.memory_space<vmem>>, vector<256x256xf32>
    %cst_20 = arith.constant dense<0.000000e+00> : vector<8x256xf32>
    %25 = tpu.matmul %9, %24, %cst_20 {dimension_numbers = #tpu.dot_dimension_numbers<[1], [0], [0], [1], [0, 0, 1, 1], [], []>} : vector<8x256xf32>, vector<256x256xf32>, vector<8x256xf32> -> vector<8x256xf32>
    %c0_21 = arith.constant 0 : index
    %c0_22 = arith.constant 0 : index
    %26 = vector.load %arg9[%c0_21, %c0_22] : memref<1x256xf32, #tpu.memory_space<vmem>>, vector<1x256xf32>
    %27 = vector.broadcast %26 : vector<1x256xf32> to vector<8x256xf32>
    %28 = arith.addf %25, %27 : vector<8x256xf32>
    %cst_23 = arith.constant 0.000000e+00 : f32
    %29 = vector.broadcast %cst_23 : f32 to vector<8x256xf32>
    %30 = arith.maximumf %28, %29 : vector<8x256xf32>
    %c0_24 = arith.constant 0 : index
    %c0_25 = arith.constant 0 : index
    %31 = vector.load %arg10[%c0_24, %c0_25] : memref<256x256xf32, #tpu.memory_space<vmem>>, vector<256x256xf32>
    %cst_26 = arith.constant dense<0.000000e+00> : vector<8x256xf32>
    %32 = tpu.matmul %30, %31, %cst_26 {dimension_numbers = #tpu.dot_dimension_numbers<[1], [0], [0], [1], [0, 0, 1, 1], [], []>} : vector<8x256xf32>, vector<256x256xf32>, vector<8x256xf32> -> vector<8x256xf32>
    %c0_27 = arith.constant 0 : index
    %c0_28 = arith.constant 0 : index
    %33 = vector.load %arg11[%c0_27, %c0_28] : memref<1x256xf32, #tpu.memory_space<vmem>>, vector<1x256xf32>
    %34 = vector.broadcast %33 : vector<1x256xf32> to vector<8x256xf32>
    %35 = arith.addf %32, %34 : vector<8x256xf32>
    %cst_29 = arith.constant 0.000000e+00 : f32
    %36 = vector.broadcast %cst_29 : f32 to vector<8x256xf32>
    %37 = arith.maximumf %35, %36 : vector<8x256xf32>
    %c0_30 = arith.constant 0 : index
    %c0_31 = arith.constant 0 : index
    %38 = vector.load %arg12[%c0_30, %c0_31] : memref<256x128xf32, #tpu.memory_space<vmem>>, vector<256x128xf32>
    %cst_32 = arith.constant dense<0.000000e+00> : vector<8x128xf32>
    %39 = tpu.matmul %23, %38, %cst_32 {dimension_numbers = #tpu.dot_dimension_numbers<[1], [0], [0], [1], [0, 0, 1, 1], [], []>} : vector<8x256xf32>, vector<256x128xf32>, vector<8x128xf32> -> vector<8x128xf32>
    %c0_33 = arith.constant 0 : index
    %c0_34 = arith.constant 0 : index
    %40 = vector.load %arg13[%c0_33, %c0_34] : memref<256x128xf32, #tpu.memory_space<vmem>>, vector<256x128xf32>
    %cst_35 = arith.constant dense<0.000000e+00> : vector<8x128xf32>
    %41 = tpu.matmul %37, %40, %cst_35 {dimension_numbers = #tpu.dot_dimension_numbers<[1], [0], [0], [1], [0, 0, 1, 1], [], []>} : vector<8x256xf32>, vector<256x128xf32>, vector<8x128xf32> -> vector<8x128xf32>
    %42 = arith.addf %39, %41 : vector<8x128xf32>
    %c0_36 = arith.constant 0 : index
    %c0_37 = arith.constant 0 : index
    %43 = vector.load %arg14[%c0_36, %c0_37] : memref<1x128xf32, #tpu.memory_space<vmem>>, vector<1x128xf32>
    %44 = vector.broadcast %43 : vector<1x128xf32> to vector<8x128xf32>
    %45 = arith.addf %42, %44 : vector<8x128xf32>
    %c0_38 = arith.constant 0 : index
    %c0_39 = arith.constant 0 : index
    %46 = vector.load %arg15[%c0_38, %c0_39] : memref<8x128xf32, #tpu.memory_space<vmem>>, vector<8x128xf32>
    tpu.vector_store %arg15[%c0_38, %c0_39], %45 {strides = array<i32>} : memref<8x128xf32, #tpu.memory_space<vmem>>, vector<8x128xf32>,
    return
  }
  func.func @transform_0(%arg0: i32) -> (i32, i32) {
    %c0_i32 = arith.constant 0 : i32
    %c0_i32_0 = arith.constant 0 : i32
    return %arg0, %c0_i32 : i32, i32
  }
  func.func @transform_1(%arg0: i32) -> (i32, i32) {
    %c0_i32 = arith.constant 0 : i32
    %c0_i32_0 = arith.constant 0 : i32
    %c0_i32_1 = arith.constant 0 : i32
    return %c0_i32, %c0_i32_0 : i32, i32
  }
  func.func @transform_2(%arg0: i32) -> (i32, i32) {
    %c0_i32 = arith.constant 0 : i32
    %c0_i32_0 = arith.constant 0 : i32
    %c0_i32_1 = arith.constant 0 : i32
    return %c0_i32, %c0_i32_0 : i32, i32
  }
  func.func @transform_3(%arg0: i32) -> (i32, i32) {
    %c0_i32 = arith.constant 0 : i32
    %c0_i32_0 = arith.constant 0 : i32
    %c0_i32_1 = arith.constant 0 : i32
    return %c0_i32, %c0_i32_0 : i32, i32
  }
  func.func @transform_4(%arg0: i32) -> (i32, i32) {
    %c0_i32 = arith.constant 0 : i32
    %c0_i32_0 = arith.constant 0 : i32
    %c0_i32_1 = arith.constant 0 : i32
    return %c0_i32, %c0_i32_0 : i32, i32
  }
  func.func @transform_5(%arg0: i32) -> (i32, i32) {
    %c0_i32 = arith.constant 0 : i32
    %c0_i32_0 = arith.constant 0 : i32
    %c0_i32_1 = arith.constant 0 : i32
    return %c0_i32, %c0_i32_0 : i32, i32
  }
  func.func @transform_6(%arg0: i32) -> (i32, i32) {
    %c0_i32 = arith.constant 0 : i32
    %c0_i32_0 = arith.constant 0 : i32
    %c0_i32_1 = arith.constant 0 : i32
    return %c0_i32, %c0_i32_0 : i32, i32
  }
  func.func @transform_7(%arg0: i32) -> (i32, i32) {
    %c0_i32 = arith.constant 0 : i32
    %c0_i32_0 = arith.constant 0 : i32
    %c0_i32_1 = arith.constant 0 : i32
    return %c0_i32, %c0_i32_0 : i32, i32
  }
  func.func @transform_8(%arg0: i32) -> (i32, i32) {
    %c0_i32 = arith.constant 0 : i32
    %c0_i32_0 = arith.constant 0 : i32
    %c0_i32_1 = arith.constant 0 : i32
    return %c0_i32, %c0_i32_0 : i32, i32
  }
  func.func @transform_9(%arg0: i32) -> (i32, i32) {
    %c0_i32 = arith.constant 0 : i32
    %c0_i32_0 = arith.constant 0 : i32
    %c0_i32_1 = arith.constant 0 : i32
    return %c0_i32, %c0_i32_0 : i32, i32
  }
  func.func @transform_10(%arg0: i32) -> (i32, i32) {
    %c0_i32 = arith.constant 0 : i32
    %c0_i32_0 = arith.constant 0 : i32
    %c0_i32_1 = arith.constant 0 : i32
    return %c0_i32, %c0_i32_0 : i32, i32
  }
  func.func @transform_11(%arg0: i32) -> (i32, i32) {
    %c0_i32 = arith.constant 0 : i32
    %c0_i32_0 = arith.constant 0 : i32
    %c0_i32_1 = arith.constant 0 : i32
    return %c0_i32, %c0_i32_0 : i32, i32
  }
  func.func @transform_12(%arg0: i32) -> (i32, i32) {
    %c0_i32 = arith.constant 0 : i32
    %c0_i32_0 = arith.constant 0 : i32
    %c0_i32_1 = arith.constant 0 : i32
    return %c0_i32, %c0_i32_0 : i32, i32
  }
  func.func @transform_13(%arg0: i32) -> (i32, i32) {
    %c0_i32 = arith.constant 0 : i32
    %c0_i32_0 = arith.constant 0 : i32
    %c0_i32_1 = arith.constant 0 : i32
    return %c0_i32, %c0_i32_0 : i32, i32
  }
  func.func @transform_14(%arg0: i32) -> (i32, i32) {
    %c0_i32 = arith.constant 0 : i32
    %c0_i32_0 = arith.constant 0 : i32
    return %arg0, %c0_i32 : i32, i32
  }
}

</mosaic_0001>

<llo_original>
// kernel: mlp_net_forward.1
$region0: #{mlp_net_forward.1}
  #allocation0 [shape = 'u32[]', space=smem, size = 0x4, offset = 0x4, fixed_abs, tag = 'smem constant byte address 0x4 - core index']
  #allocation1 [shape = 'u32[72,128]{1,0:T(1,128)}', space=vmem, size = 0x9000, scoped, tag = 'internal scratch']
  %s0 = inlined_call_operand.vmem [shape: f32[8,8], index: 0, kind: input, shape index: {}]
  %s1 = inlined_call_operand.vmem [shape: f32[8,512], index: 1, kind: input, shape index: {}]
  %s2 = inlined_call_operand.vmem [shape: f32[1,512], index: 2, kind: input, shape index: {}]
  %s3 = inlined_call_operand.vmem [shape: f32[256,256], index: 3, kind: input, shape index: {}]
  %s4 = inlined_call_operand.vmem [shape: f32[1,256], index: 4, kind: input, shape index: {}]
  %s5 = inlined_call_operand.vmem [shape: f32[256,256], index: 5, kind: input, shape index: {}]
  %s6 = inlined_call_operand.vmem [shape: f32[1,256], index: 6, kind: input, shape index: {}]
  %s7 = inlined_call_operand.vmem [shape: f32[256,256], index: 7, kind: input, shape index: {}]
  %s8 = inlined_call_operand.vmem [shape: f32[1,256], index: 8, kind: input, shape index: {}]
  %s9 = inlined_call_operand.vmem [shape: f32[256,256], index: 9, kind: input, shape index: {}]
  %s10 = inlined_call_operand.vmem [shape: f32[1,256], index: 10, kind: input, shape index: {}]
  %s11 = inlined_call_operand.vmem [shape: f32[256,128], index: 11, kind: input, shape index: {}]
  %s12 = inlined_call_operand.vmem [shape: f32[256,128], index: 12, kind: input, shape index: {}]
  %s13 = inlined_call_operand.vmem [shape: f32[1,128], index: 13, kind: input, shape index: {}]
  %s14 = inlined_call_operand.vmem [shape: f32[8,128], index: 14, kind: output, shape index: {}]
  %s15 = sld [smem:[#allocation0]]
  $region66: #{mlp_net_forward.1} parent=0
    _
  %s17 = ssub.s32 1, %s15
  %s18 = scalar_select 0, %s17, %s15
  // Predicated region
  $region2: #{mlp_net_forward.1} parent=0 // pred_check
    _
  $region3: #{mlp_net_forward.1} parent=0 // pred_check_branch
    %20 = sbr.rel (0) target = $region5
  $region4: #{mlp_net_forward.1} parent=0 // pred_region
    _
  $region5: #{mlp_net_forward.1} parent=0 // pred_fallthru
    _
  // Predicated region
  $region6: #{mlp_net_forward.1} parent=0 // pred_check
    _
  $region7: #{mlp_net_forward.1} parent=0 // pred_check_branch
    %22 = sbr.rel (0) target = $region9
  $region8: #{mlp_net_forward.1} parent=0 // pred_region
    _
  $region9: #{mlp_net_forward.1} parent=0 // pred_fallthru
    _
  // Predicated region
  $region10: #{mlp_net_forward.1} parent=0 // pred_check
    _
  $region11: #{mlp_net_forward.1} parent=0 // pred_check_branch
    %24 = sbr.rel (0) target = $region13
  $region12: #{mlp_net_forward.1} parent=0 // pred_region
    _
  $region13: #{mlp_net_forward.1} parent=0 // pred_fallthru
    _
  // Predicated region
  $region14: #{mlp_net_forward.1} parent=0 // pred_check
    _
  $region15: #{mlp_net_forward.1} parent=0 // pred_check_branch
    %26 = sbr.rel (0) target = $region17
  $region16: #{mlp_net_forward.1} parent=0 // pred_region
    _
  $region17: #{mlp_net_forward.1} parent=0 // pred_fallthru
    _
  // Predicated region
  $region18: #{mlp_net_forward.1} parent=0 // pred_check
    _
  $region19: #{mlp_net_forward.1} parent=0 // pred_check_branch
    %28 = sbr.rel (0) target = $region21
  $region20: #{mlp_net_forward.1} parent=0 // pred_region
    _
  $region21: #{mlp_net_forward.1} parent=0 // pred_fallthru
    _
  // Predicated region
  $region22: #{mlp_net_forward.1} parent=0 // pred_check
    _
  $region23: #{mlp_net_forward.1} parent=0 // pred_check_branch
    %30 = sbr.rel (0) target = $region25
  $region24: #{mlp_net_forward.1} parent=0 // pred_region
    _
  $region25: #{mlp_net_forward.1} parent=0 // pred_fallthru
    _
  // Predicated region
  $region26: #{mlp_net_forward.1} parent=0 // pred_check
    _
  $region27: #{mlp_net_forward.1} parent=0 // pred_check_branch
    %32 = sbr.rel (0) target = $region29
  $region28: #{mlp_net_forward.1} parent=0 // pred_region
    _
  $region29: #{mlp_net_forward.1} parent=0 // pred_fallthru
    _
  // Predicated region
  $region30: #{mlp_net_forward.1} parent=0 // pred_check
    _
  $region31: #{mlp_net_forward.1} parent=0 // pred_check_branch
    %34 = sbr.rel (0) target = $region33
  $region32: #{mlp_net_forward.1} parent=0 // pred_region
    _
  $region33: #{mlp_net_forward.1} parent=0 // pred_fallthru
    _
  // Predicated region
  $region34: #{mlp_net_forward.1} parent=0 // pred_check
    _
  $region35: #{mlp_net_forward.1} parent=0 // pred_check_branch
    %36 = sbr.rel (0) target = $region37
  $region36: #{mlp_net_forward.1} parent=0 // pred_region
    _
  $region37: #{mlp_net_forward.1} parent=0 // pred_fallthru
    _
  // Predicated region
  $region38: #{mlp_net_forward.1} parent=0 // pred_check
    _
  $region39: #{mlp_net_forward.1} parent=0 // pred_check_branch
    %38 = sbr.rel (0) target = $region41
  $region40: #{mlp_net_forward.1} parent=0 // pred_region
    _
  $region41: #{mlp_net_forward.1} parent=0 // pred_fallthru
    _
  // Predicated region
  $region42: #{mlp_net_forward.1} parent=0 // pred_check
    _
  $region43: #{mlp_net_forward.1} parent=0 // pred_check_branch
    %40 = sbr.rel (0) target = $region45
  $region44: #{mlp_net_forward.1} parent=0 // pred_region
    _
  $region45: #{mlp_net_forward.1} parent=0 // pred_fallthru
    _
  // Predicated region
  $region46: #{mlp_net_forward.1} parent=0 // pred_check
    _
  $region47: #{mlp_net_forward.1} parent=0 // pred_check_branch
    %42 = sbr.rel (0) target = $region49
  $region48: #{mlp_net_forward.1} parent=0 // pred_region
    _
  $region49: #{mlp_net_forward.1} parent=0 // pred_fallthru
    _
  // Predicated region
  $region50: #{mlp_net_forward.1} parent=0 // pred_check
    _
  $region51: #{mlp_net_forward.1} parent=0 // pred_check_branch
    %44 = sbr.rel (0) target = $region53
  $region52: #{mlp_net_forward.1} parent=0 // pred_region
    _
  $region53: #{mlp_net_forward.1} parent=0 // pred_fallthru
    _
  // Predicated region
  $region54: #{mlp_net_forward.1} parent=0 // pred_check
    _
  $region55: #{mlp_net_forward.1} parent=0 // pred_check_branch
    %46 = sbr.rel (0) target = $region57
  $region56: #{mlp_net_forward.1} parent=0 // pred_region
    _
  $region57: #{mlp_net_forward.1} parent=0 // pred_fallthru
    _
  %v47 = vld [vmem:[%s0] sm:$0xff]
  %v48 = vld [vmem:[%s1] sm:$0xff]
  %v49 = vld [vmem:[%s1 + $0x8] sm:$0xff]
  %v50 = vld [vmem:[%s1 + $0x10] sm:$0xff]
  %v51 = vld [vmem:[%s1 + $0x18] sm:$0xff]
  %v52 = vld [vmem:[%s2] sm:$0xf]
  %v54 = vperm.slane %v52, 0
  %v55 = vperm.slane %v52, 1
  %v56 = vperm.slane %v52, 2
  %v57 = vperm.slane %v52, 3
  %vm62 = vcmask 64512
  %v64 = vsel %vm62, %v47, 0
  %66 = vmatpush.msra.mxu0 0.0
  %67 = vmatpush.msra.mxu0 0.0
  %68 = vmatpush.msra.mxu0 0.0
  %69 = vmatpush.msra.mxu0 0.0
  %70 = vmatpush.msra.mxu0 0.0
  %71 = vmatpush.msra.mxu0 0.0
  %72 = vmatpush.msra.mxu0 0.0
  %73 = vmatpush.msra.mxu0 0.0
  %74 = vmatpush.msra.mxu0 0.0
  %75 = vmatpush.msra.mxu0 0.0
  %76 = vmatpush.msra.mxu0 0.0
  %77 = vmatpush.msra.mxu0 0.0
  %78 = vmatpush.msra.mxu0 0.0
  %79 = vmatpush.msra.mxu0 0.0
  %80 = vmatpush.msra.mxu0 0.0
  %81 = vmatpush.msra.mxu0 %v48
  %82 = vmatmul.f32.gmra.mxu0 %v64
  %v83 = vpop.f32.mrf.mxu0
  %v84 = vadd.f32 %v54, %v83
  %85 = vdwg.mxu0
  %86 = vmatpush.msra.mxu0 0.0
  %87 = vmatpush.msra.mxu0 0.0
  %88 = vmatpush.msra.mxu0 0.0
  %89 = vmatpush.msra.mxu0 0.0
  %90 = vmatpush.msra.mxu0 0.0
  %91 = vmatpush.msra.mxu0 0.0
  %92 = vmatpush.msra.mxu0 0.0
  %93 = vmatpush.msra.mxu0 0.0
  %94 = vmatpush.msra.mxu0 0.0
  %95 = vmatpush.msra.mxu0 0.0
  %96 = vmatpush.msra.mxu0 0.0
  %97 = vmatpush.msra.mxu0 0.0
  %98 = vmatpush.msra.mxu0 0.0
  %99 = vmatpush.msra.mxu0 0.0
  %100 = vmatpush.msra.mxu0 0.0
  %101 = vmatpush.msra.mxu0 %v49
  %102 = vmatmul.f32.gmra.mxu0 %v64
  %v103 = vpop.f32.mrf.mxu0
  %v104 = vadd.f32 %v55, %v103
  %105 = vdwg.mxu0
  %106 = vmatpush.msra.mxu0 0.0
  %107 = vmatpush.msra.mxu0 0.0
  %108 = vmatpush.msra.mxu0 0.0
  %109 = vmatpush.msra.mxu0 0.0
  %110 = vmatpush.msra.mxu0 0.0
  %111 = vmatpush.msra.mxu0 0.0
  %112 = vmatpush.msra.mxu0 0.0
  %113 = vmatpush.msra.mxu0 0.0
  %114 = vmatpush.msra.mxu0 0.0
  %115 = vmatpush.msra.mxu0 0.0
  %116 = vmatpush.msra.mxu0 0.0
  %117 = vmatpush.msra.mxu0 0.0
  %118 = vmatpush.msra.mxu0 0.0
  %119 = vmatpush.msra.mxu0 0.0
  %120 = vmatpush.msra.mxu0 0.0
  %121 = vmatpush.msra.mxu0 %v50
  %122 = vmatmul.f32.gmra.mxu0 %v64
  %v123 = vpop.f32.mrf.mxu0
  %v124 = vadd.f32 %v56, %v123
  %125 = vdwg.mxu0
  %126 = vmatpush.msra.mxu0 0.0
  %127 = vmatpush.msra.mxu0 0.0
  %128 = vmatpush.msra.mxu0 0.0
  %129 = vmatpush.msra.mxu0 0.0
  %130 = vmatpush.msra.mxu0 0.0
  %131 = vmatpush.msra.mxu0 0.0
  %132 = vmatpush.msra.mxu0 0.0
  %133 = vmatpush.msra.mxu0 0.0
  %134 = vmatpush.msra.mxu0 0.0
  %135 = vmatpush.msra.mxu0 0.0
  %136 = vmatpush.msra.mxu0 0.0
  %137 = vmatpush.msra.mxu0 0.0
  %138 = vmatpush.msra.mxu0 0.0
  %139 = vmatpush.msra.mxu0 0.0
  %140 = vmatpush.msra.mxu0 0.0
  %141 = vmatpush.msra.mxu0 %v51
  %142 = vmatmul.f32.gmra.mxu0 %v64
  %v143 = vpop.f32.mrf.mxu0
  %v144 = vadd.f32 %v57, %v143
  %145 = vdwg.mxu0
  %v146 = vmax.f32 %v84, 0.0
  %v147 = vmax.f32 %v104, 0.0
  %v148 = vmax.f32 %v124, 0.0
  %v149 = vmax.f32 %v144, 0.0
  %v150 = vld [vmem:[%s3] sm:$0xff]
  %v151 = vld [vmem:[%s3 + $0x8] sm:$0xff]
  %v152 = vld [vmem:[%s3 + $0x10] sm:$0xff]
  %v153 = vld [vmem:[%s3 + $0x18] sm:$0xff]
  %v154 = vld [vmem:[%s3 + $0x20] sm:$0xff]
  %v155 = vld [vmem:[%s3 + $0x28] sm:$0xff]
  %v156 = vld [vmem:[%s3 + $0x30] sm:$0xff]
  %v157 = vld [vmem:[%s3 + $0x38] sm:$0xff]
  %v158 = vld [vmem:[%s3 + $0x40] sm:$0xff]
  %v159 = vld [vmem:[%s3 + $0x48] sm:$0xff]
  %v160 = vld [vmem:[%s3 + $0x50] sm:$0xff]
  %v161 = vld [vmem:[%s3 + $0x58] sm:$0xff]
  %v162 = vld [vmem:[%s3 + $0x60] sm:$0xff]
  %v163 = vld [vmem:[%s3 + $0x68] sm:$0xff]
  %v164 = vld [vmem:[%s3 + $0x70] sm:$0xff]
  %v165 = vld [vmem:[%s3 + $0x78] sm:$0xff]
  %v166 = vld [vmem:[%s3 + $0x80] sm:$0xff]
  %v167 = vld [vmem:[%s3 + $0x88] sm:$0xff]
  %v168 = vld [vmem:[%s3 + $0x90] sm:$0xff]
  %v169 = vld [vmem:[%s3 + $0x98] sm:$0xff]
  %v170 = vld [vmem:[%s3 + $0xa0] sm:$0xff]
  %v171 = vld [vmem:[%s3 + $0xa8] sm:$0xff]
  %v172 = vld [vmem:[%s3 + $0xb0] sm:$0xff]
  %v173 = vld [vmem:[%s3 + $0xb8] sm:$0xff]
  %v174 = vld [vmem:[%s3 + $0xc0] sm:$0xff]
  %v175 = vld [vmem:[%s3 + $0xc8] sm:$0xff]
  %v176 = vld [vmem:[%s3 + $0xd0] sm:$0xff]
  %v177 = vld [vmem:[%s3 + $0xd8] sm:$0xff]
  %v178 = vld [vmem:[%s3 + $0xe0] sm:$0xff]
  %v179 = vld [vmem:[%s3 + $0xe8] sm:$0xff]
  %v180 = vld [vmem:[%s3 + $0xf0] sm:$0xff]
  %v181 = vld [vmem:[%s3 + $0xf8] sm:$0xff]
  %v182 = vld [vmem:[%s3 + $0x100] sm:$0xff]
  %v183 = vld [vmem:[%s3 + $0x108] sm:$0xff]
  %v184 = vld [vmem:[%s3 + $0x110] sm:$0xff]
  %v185 = vld [vmem:[%s3 + $0x118] sm:$0xff]
  %v186 = vld [vmem:[%s3 + $0x120] sm:$0xff]
  %v187 = vld [vmem:[%s3 + $0x128] sm:$0xff]
  %v188 = vld [vmem:[%s3 + $0x130] sm:$0xff]
  %v189 = vld [vmem:[%s3 + $0x138] sm:$0xff]
  %v190 = vld [vmem:[%s3 + $0x140] sm:$0xff]
  %v191 = vld [vmem:[%s3 + $0x148] sm:$0xff]
  %v192 = vld [vmem:[%s3 + $0x150] sm:$0xff]
  %v193 = vld [vmem:[%s3 + $0x158] sm:$0xff]
  %v194 = vld [vmem:[%s3 + $0x160] sm:$0xff]
  %v195 = vld [vmem:[%s3 + $0x168] sm:$0xff]
  %v196 = vld [vmem:[%s3 + $0x170] sm:$0xff]
  %v197 = vld [vmem:[%s3 + $0x178] sm:$0xff]
  %v198 = vld [vmem:[%s3 + $0x180] sm:$0xff]
  %v199 = vld [vmem:[%s3 + $0x188] sm:$0xff]
  %v200 = vld [vmem:[%s3 + $0x190] sm:$0xff]
  %v201 = vld [vmem:[%s3 + $0x198] sm:$0xff]
  %v202 = vld [vmem:[%s3 + $0x1a0] sm:$0xff]
  %v203 = vld [vmem:[%s3 + $0x1a8] sm:$0xff]
  %v204 = vld [vmem:[%s3 + $0x1b0] sm:$0xff]
  %v205 = vld [vmem:[%s3 + $0x1b8] sm:$0xff]
  %v206 = vld [vmem:[%s3 + $0x1c0] sm:$0xff]
  %v207 = vld [vmem:[%s3 + $0x1c8] sm:$0xff]
  %v208 = vld [vmem:[%s3 + $0x1d0] sm:$0xff]
  %v209 = vld [vmem:[%s3 + $0x1d8] sm:$0xff]
  %v210 = vld [vmem:[%s3 + $0x1e0] sm:$0xff]
  %v211 = vld [vmem:[%s3 + $0x1e8] sm:$0xff]
  %v212 = vld [vmem:[%s3 + $0x1f0] sm:$0xff]
  %v213 = vld [vmem:[%s3 + $0x1f8] sm:$0xff]
  %v214 = vld [vmem:[%s4] sm:$0x3]
  %v216 = vperm.slane %v214, 0
  %v217 = vperm.slane %v214, 1
  %220 = vmatpush.msra.mxu0 %v180
  %221 = vmatpush.msra.mxu0 %v178
  %222 = vmatpush.msra.mxu0 %v176
  %223 = vmatpush.msra.mxu0 %v174
  %224 = vmatpush.msra.mxu0 %v172
  %225 = vmatpush.msra.mxu0 %v170
  %226 = vmatpush.msra.mxu0 %v168
  %227 = vmatpush.msra.mxu0 %v166
  %228 = vmatpush.msra.mxu0 %v164
  %229 = vmatpush.msra.mxu0 %v162
  %230 = vmatpush.msra.mxu0 %v160
  %231 = vmatpush.msra.mxu0 %v158
  %232 = vmatpush.msra.mxu0 %v156
  %233 = vmatpush.msra.mxu0 %v154
  %234 = vmatpush.msra.mxu0 %v152
  %235 = vmatpush.msra.mxu0 %v150
  %236 = vmatmul.f32.gmra.mxu0 %v146
  %v237 = vpop.f32.mrf.mxu0
  %v238 = vadd.f32 %v216, %v237
  %239 = vdwg.mxu0
  %240 = vmatpush.msra.mxu0 %v212
  %241 = vmatpush.msra.mxu0 %v210
  %242 = vmatpush.msra.mxu0 %v208
  %243 = vmatpush.msra.mxu0 %v206
  %244 = vmatpush.msra.mxu0 %v204
  %245 = vmatpush.msra.mxu0 %v202
  %246 = vmatpush.msra.mxu0 %v200
  %247 = vmatpush.msra.mxu0 %v198
  %248 = vmatpush.msra.mxu0 %v196
  %249 = vmatpush.msra.mxu0 %v194
  %250 = vmatpush.msra.mxu0 %v192
  %251 = vmatpush.msra.mxu0 %v190
  %252 = vmatpush.msra.mxu0 %v188
  %253 = vmatpush.msra.mxu0 %v186
  %254 = vmatpush.msra.mxu0 %v184
  %255 = vmatpush.msra.mxu0 %v182
  %256 = vmatmul.f32.gmra.mxu0 %v147
  %v257 = vpop.f32.mrf.mxu0
  %v258 = vadd.f32 %v238, %v257
  %259 = vdwg.mxu0
  %260 = vmatpush.msra.mxu0 %v181
  %261 = vmatpush.msra.mxu0 %v179
  %262 = vmatpush.msra.mxu0 %v177
  %263 = vmatpush.msra.mxu0 %v175
  %264 = vmatpush.msra.mxu0 %v173
  %265 = vmatpush.msra.mxu0 %v171
  %266 = vmatpush.msra.mxu0 %v169
  %267 = vmatpush.msra.mxu0 %v167
  %268 = vmatpush.msra.mxu0 %v165
  %269 = vmatpush.msra.mxu0 %v163
  %270 = vmatpush.msra.mxu0 %v161
  %271 = vmatpush.msra.mxu0 %v159
  %272 = vmatpush.msra.mxu0 %v157
  %273 = vmatpush.msra.mxu0 %v155
  %274 = vmatpush.msra.mxu0 %v153
  %275 = vmatpush.msra.mxu0 %v151
  %276 = vmatmul.f32.gmra.mxu0 %v146
  %v277 = vpop.f32.mrf.mxu0
  %v278 = vadd.f32 %v217, %v277
  %279 = vdwg.mxu0
  %280 = vmatpush.msra.mxu0 %v213
  %281 = vmatpush.msra.mxu0 %v211
  %282 = vmatpush.msra.mxu0 %v209
  %283 = vmatpush.msra.mxu0 %v207
  %284 = vmatpush.msra.mxu0 %v205
  %285 = vmatpush.msra.mxu0 %v203
  %286 = vmatpush.msra.mxu0 %v201
  %287 = vmatpush.msra.mxu0 %v199
  %288 = vmatpush.msra.mxu0 %v197
  %289 = vmatpush.msra.mxu0 %v195
  %290 = vmatpush.msra.mxu0 %v193
  %291 = vmatpush.msra.mxu0 %v191
  %292 = vmatpush.msra.mxu0 %v189
  %293 = vmatpush.msra.mxu0 %v187
  %294 = vmatpush.msra.mxu0 %v185
  %295 = vmatpush.msra.mxu0 %v183
  %296 = vmatmul.f32.gmra.mxu0 %v147
  %v297 = vpop.f32.mrf.mxu0
  %v298 = vadd.f32 %v278, %v297
  %299 = vdwg.mxu0
  %v300 = vmax.f32 %v258, 0.0
  %v301 = vmax.f32 %v298, 0.0
  %v302 = vld [vmem:[%s5] sm:$0xff]
  %v303 = vld [vmem:[%s5 + $0x8] sm:$0xff]
  %v304 = vld [vmem:[%s5 + $0x10] sm:$0xff]
  %v305 = vld [vmem:[%s5 + $0x18] sm:$0xff]
  %v306 = vld [vmem:[%s5 + $0x20] sm:$0xff]
  %v307 = vld [vmem:[%s5 + $0x28] sm:$0xff]
  %v308 = vld [vmem:[%s5 + $0x30] sm:$0xff]
  %v309 = vld [vmem:[%s5 + $0x38] sm:$0xff]
  %v310 = vld [vmem:[%s5 + $0x40] sm:$0xff]
  %v311 = vld [vmem:[%s5 + $0x48] sm:$0xff]
  %v312 = vld [vmem:[%s5 + $0x50] sm:$0xff]
  %v313 = vld [vmem:[%s5 + $0x58] sm:$0xff]
  %v314 = vld [vmem:[%s5 + $0x60] sm:$0xff]
  %v315 = vld [vmem:[%s5 + $0x68] sm:$0xff]
  %v316 = vld [vmem:[%s5 + $0x70] sm:$0xff]
  %v317 = vld [vmem:[%s5 + $0x78] sm:$0xff]
  %v318 = vld [vmem:[%s5 + $0x80] sm:$0xff]
  %v319 = vld [vmem:[%s5 + $0x88] sm:$0xff]
  %v320 = vld [vmem:[%s5 + $0x90] sm:$0xff]
  %v321 = vld [vmem:[%s5 + $0x98] sm:$0xff]
  %v322 = vld [vmem:[%s5 + $0xa0] sm:$0xff]
  %v323 = vld [vmem:[%s5 + $0xa8] sm:$0xff]
  %v324 = vld [vmem:[%s5 + $0xb0] sm:$0xff]
  %v325 = vld [vmem:[%s5 + $0xb8] sm:$0xff]
  %v326 = vld [vmem:[%s5 + $0xc0] sm:$0xff]
  %v327 = vld [vmem:[%s5 + $0xc8] sm:$0xff]
  %v328 = vld [vmem:[%s5 + $0xd0] sm:$0xff]
  %v329 = vld [vmem:[%s5 + $0xd8] sm:$0xff]
  %v330 = vld [vmem:[%s5 + $0xe0] sm:$0xff]
  %v331 = vld [vmem:[%s5 + $0xe8] sm:$0xff]
  %v332 = vld [vmem:[%s5 + $0xf0] sm:$0xff]
  %v333 = vld [vmem:[%s5 + $0xf8] sm:$0xff]
  %v334 = vld [vmem:[%s5 + $0x100] sm:$0xff]
  %v335 = vld [vmem:[%s5 + $0x108] sm:$0xff]
  %v336 = vld [vmem:[%s5 + $0x110] sm:$0xff]
  %v337 = vld [vmem:[%s5 + $0x118] sm:$0xff]
  %v338 = vld [vmem:[%s5 + $0x120] sm:$0xff]
  %v339 = vld [vmem:[%s5 + $0x128] sm:$0xff]
  %v340 = vld [vmem:[%s5 + $0x130] sm:$0xff]
  %v341 = vld [vmem:[%s5 + $0x138] sm:$0xff]
  %v342 = vld [vmem:[%s5 + $0x140] sm:$0xff]
  %v343 = vld [vmem:[%s5 + $0x148] sm:$0xff]
  %v344 = vld [vmem:[%s5 + $0x150] sm:$0xff]
  %v345 = vld [vmem:[%s5 + $0x158] sm:$0xff]
  %v346 = vld [vmem:[%s5 + $0x160] sm:$0xff]
  %v347 = vld [vmem:[%s5 + $0x168] sm:$0xff]
  %v348 = vld [vmem:[%s5 + $0x170] sm:$0xff]
  %v349 = vld [vmem:[%s5 + $0x178] sm:$0xff]
  %v350 = vld [vmem:[%s5 + $0x180] sm:$0xff]
  %v351 = vld [vmem:[%s5 + $0x188] sm:$0xff]
  %v352 = vld [vmem:[%s5 + $0x190] sm:$0xff]
  %v353 = vld [vmem:[%s5 + $0x198] sm:$0xff]
  %v354 = vld [vmem:[%s5 + $0x1a0] sm:$0xff]
  %v355 = vld [vmem:[%s5 + $0x1a8] sm:$0xff]
  %v356 = vld [vmem:[%s5 + $0x1b0] sm:$0xff]
  %v357 = vld [vmem:[%s5 + $0x1b8] sm:$0xff]
  %v358 = vld [vmem:[%s5 + $0x1c0] sm:$0xff]
  %v359 = vld [vmem:[%s5 + $0x1c8] sm:$0xff]
  %v360 = vld [vmem:[%s5 + $0x1d0] sm:$0xff]
  %v361 = vld [vmem:[%s5 + $0x1d8] sm:$0xff]
  %v362 = vld [vmem:[%s5 + $0x1e0] sm:$0xff]
  %v363 = vld [vmem:[%s5 + $0x1e8] sm:$0xff]
  %v364 = vld [vmem:[%s5 + $0x1f0] sm:$0xff]
  %v365 = vld [vmem:[%s5 + $0x1f8] sm:$0xff]
  %v366 = vld [vmem:[%s6] sm:$0x3]
  %v368 = vperm.slane %v366, 0
  %v369 = vperm.slane %v366, 1
  %372 = vmatpush.msra.mxu0 %v332
  %373 = vmatpush.msra.mxu0 %v330
  %374 = vmatpush.msra.mxu0 %v328
  %375 = vmatpush.msra.mxu0 %v326
  %376 = vmatpush.msra.mxu0 %v324
  %377 = vmatpush.msra.mxu0 %v322
  %378 = vmatpush.msra.mxu0 %v320
  %379 = vmatpush.msra.mxu0 %v318
  %380 = vmatpush.msra.mxu0 %v316
  %381 = vmatpush.msra.mxu0 %v314
  %382 = vmatpush.msra.mxu0 %v312
  %383 = vmatpush.msra.mxu0 %v310
  %384 = vmatpush.msra.mxu0 %v308
  %385 = vmatpush.msra.mxu0 %v306
  %386 = vmatpush.msra.mxu0 %v304
  %387 = vmatpush.msra.mxu0 %v302
  %388 = vmatmul.f32.gmra.mxu0 %v300
  %v389 = vpop.f32.mrf.mxu0
  %v390 = vadd.f32 %v368, %v389
  %391 = vdwg.mxu0
  %392 = vmatpush.msra.mxu0 %v364
  %393 = vmatpush.msra.mxu0 %v362
  %394 = vmatpush.msra.mxu0 %v360
  %395 = vmatpush.msra.mxu0 %v358
  %396 = vmatpush.msra.mxu0 %v356
  %397 = vmatpush.msra.mxu0 %v354
  %398 = vmatpush.msra.mxu0 %v352
  %399 = vmatpush.msra.mxu0 %v350
  %400 = vmatpush.msra.mxu0 %v348
  %401 = vmatpush.msra.mxu0 %v346
  %402 = vmatpush.msra.mxu0 %v344
  %403 = vmatpush.msra.mxu0 %v342
  %404 = vmatpush.msra.mxu0 %v340
  %405 = vmatpush.msra.mxu0 %v338
  %406 = vmatpush.msra.mxu0 %v336
  %407 = vmatpush.msra.mxu0 %v334
  %408 = vmatmul.f32.gmra.mxu0 %v301
  %v409 = vpop.f32.mrf.mxu0
  %v410 = vadd.f32 %v390, %v409
  %411 = vdwg.mxu0
  %412 = vmatpush.msra.mxu0 %v333
  %413 = vmatpush.msra.mxu0 %v331
  %414 = vmatpush.msra.mxu0 %v329
  %415 = vmatpush.msra.mxu0 %v327
  %416 = vmatpush.msra.mxu0 %v325
  %417 = vmatpush.msra.mxu0 %v323
  %418 = vmatpush.msra.mxu0 %v321
  %419 = vmatpush.msra.mxu0 %v319
  %420 = vmatpush.msra.mxu0 %v317
  %421 = vmatpush.msra.mxu0 %v315
  %422 = vmatpush.msra.mxu0 %v313
  %423 = vmatpush.msra.mxu0 %v311
  %424 = vmatpush.msra.mxu0 %v309
  %425 = vmatpush.msra.mxu0 %v307
  %426 = vmatpush.msra.mxu0 %v305
  %427 = vmatpush.msra.mxu0 %v303
  %428 = vmatmul.f32.gmra.mxu0 %v300
  %v429 = vpop.f32.mrf.mxu0
  %v430 = vadd.f32 %v369, %v429
  %431 = vdwg.mxu0
  %432 = vmatpush.msra.mxu0 %v365
  %433 = vmatpush.msra.mxu0 %v363
  %434 = vmatpush.msra.mxu0 %v361
  %435 = vmatpush.msra.mxu0 %v359
  %436 = vmatpush.msra.mxu0 %v357
  %437 = vmatpush.msra.mxu0 %v355
  %438 = vmatpush.msra.mxu0 %v353
  %439 = vmatpush.msra.mxu0 %v351
  %440 = vmatpush.msra.mxu0 %v349
  %441 = vmatpush.msra.mxu0 %v347
  %442 = vmatpush.msra.mxu0 %v345
  %443 = vmatpush.msra.mxu0 %v343
  %444 = vmatpush.msra.mxu0 %v341
  %445 = vmatpush.msra.mxu0 %v339
  %446 = vmatpush.msra.mxu0 %v337
  %447 = vmatpush.msra.mxu0 %v335
  %448 = vmatmul.f32.gmra.mxu0 %v301
  %v449 = vpop.f32.mrf.mxu0
  %v450 = vadd.f32 %v430, %v449
  %451 = vdwg.mxu0
  %v452 = vmax.f32 %v410, 0.0
  %v453 = vmax.f32 %v450, 0.0
  %v454 = vld [vmem:[%s7] sm:$0xff]
  %v455 = vld [vmem:[%s7 + $0x8] sm:$0xff]
  %v456 = vld [vmem:[%s7 + $0x10] sm:$0xff]
  %v457 = vld [vmem:[%s7 + $0x18] sm:$0xff]
  %v458 = vld [vmem:[%s7 + $0x20] sm:$0xff]
  %v459 = vld [vmem:[%s7 + $0x28] sm:$0xff]
  %v460 = vld [vmem:[%s7 + $0x30] sm:$0xff]
  %v461 = vld [vmem:[%s7 + $0x38] sm:$0xff]
  %v462 = vld [vmem:[%s7 + $0x40] sm:$0xff]
  %v463 = vld [vmem:[%s7 + $0x48] sm:$0xff]
  %v464 = vld [vmem:[%s7 + $0x50] sm:$0xff]
  %v465 = vld [vmem:[%s7 + $0x58] sm:$0xff]
  %v466 = vld [vmem:[%s7 + $0x60] sm:$0xff]
  %v467 = vld [vmem:[%s7 + $0x68] sm:$0xff]
  %v468 = vld [vmem:[%s7 + $0x70] sm:$0xff]
  %v469 = vld [vmem:[%s7 + $0x78] sm:$0xff]
  %v470 = vld [vmem:[%s7 + $0x80] sm:$0xff]
  %v471 = vld [vmem:[%s7 + $0x88] sm:$0xff]
  %v472 = vld [vmem:[%s7 + $0x90] sm:$0xff]
  %v473 = vld [vmem:[%s7 + $0x98] sm:$0xff]
  %v474 = vld [vmem:[%s7 + $0xa0] sm:$0xff]
  %v475 = vld [vmem:[%s7 + $0xa8] sm:$0xff]
  %v476 = vld [vmem:[%s7 + $0xb0] sm:$0xff]
  %v477 = vld [vmem:[%s7 + $0xb8] sm:$0xff]
  %v478 = vld [vmem:[%s7 + $0xc0] sm:$0xff]
  %v479 = vld [vmem:[%s7 + $0xc8] sm:$0xff]
  %v480 = vld [vmem:[%s7 + $0xd0] sm:$0xff]
  %v481 = vld [vmem:[%s7 + $0xd8] sm:$0xff]
  %v482 = vld [vmem:[%s7 + $0xe0] sm:$0xff]
  %v483 = vld [vmem:[%s7 + $0xe8] sm:$0xff]
  %v484 = vld [vmem:[%s7 + $0xf0] sm:$0xff]
  %v485 = vld [vmem:[%s7 + $0xf8] sm:$0xff]
  %v486 = vld [vmem:[%s7 + $0x100] sm:$0xff]
  %v487 = vld [vmem:[%s7 + $0x108] sm:$0xff]
  %v488 = vld [vmem:[%s7 + $0x110] sm:$0xff]
  %v489 = vld [vmem:[%s7 + $0x118] sm:$0xff]
  %v490 = vld [vmem:[%s7 + $0x120] sm:$0xff]
  %v491 = vld [vmem:[%s7 + $0x128] sm:$0xff]
  %v492 = vld [vmem:[%s7 + $0x130] sm:$0xff]
  %v493 = vld [vmem:[%s7 + $0x138] sm:$0xff]
  %v494 = vld [vmem:[%s7 + $0x140] sm:$0xff]
  %v495 = vld [vmem:[%s7 + $0x148] sm:$0xff]
  %v496 = vld [vmem:[%s7 + $0x150] sm:$0xff]
  %v497 = vld [vmem:[%s7 + $0x158] sm:$0xff]
  %v498 = vld [vmem:[%s7 + $0x160] sm:$0xff]
  %v499 = vld [vmem:[%s7 + $0x168] sm:$0xff]
  %v500 = vld [vmem:[%s7 + $0x170] sm:$0xff]
  %v501 = vld [vmem:[%s7 + $0x178] sm:$0xff]
  %v502 = vld [vmem:[%s7 + $0x180] sm:$0xff]
  %v503 = vld [vmem:[%s7 + $0x188] sm:$0xff]
  %v504 = vld [vmem:[%s7 + $0x190] sm:$0xff]
  %v505 = vld [vmem:[%s7 + $0x198] sm:$0xff]
  %v506 = vld [vmem:[%s7 + $0x1a0] sm:$0xff]
  %v507 = vld [vmem:[%s7 + $0x1a8] sm:$0xff]
  %v508 = vld [vmem:[%s7 + $0x1b0] sm:$0xff]
  %v509 = vld [vmem:[%s7 + $0x1b8] sm:$0xff]
  %v510 = vld [vmem:[%s7 + $0x1c0] sm:$0xff]
  %v511 = vld [vmem:[%s7 + $0x1c8] sm:$0xff]
  %v512 = vld [vmem:[%s7 + $0x1d0] sm:$0xff]
  %v513 = vld [vmem:[%s7 + $0x1d8] sm:$0xff]
  %v514 = vld [vmem:[%s7 + $0x1e0] sm:$0xff]
  %v515 = vld [vmem:[%s7 + $0x1e8] sm:$0xff]
  %v516 = vld [vmem:[%s7 + $0x1f0] sm:$0xff]
  %v517 = vld [vmem:[%s7 + $0x1f8] sm:$0xff]
  %v518 = vld [vmem:[%s8] sm:$0x3]
  %v520 = vperm.slane %v518, 0
  %v521 = vperm.slane %v518, 1
  %524 = vmatpush.msra.mxu0 %v484
  %525 = vmatpush.msra.mxu0 %v482
  %526 = vmatpush.msra.mxu0 %v480
  %527 = vmatpush.msra.mxu0 %v478
  %528 = vmatpush.msra.mxu0 %v476
  %529 = vmatpush.msra.mxu0 %v474
  %530 = vmatpush.msra.mxu0 %v472
  %531 = vmatpush.msra.mxu0 %v470
  %532 = vmatpush.msra.mxu0 %v468
  %533 = vmatpush.msra.mxu0 %v466
  %534 = vmatpush.msra.mxu0 %v464
  %535 = vmatpush.msra.mxu0 %v462
  %536 = vmatpush.msra.mxu0 %v460
  %537 = vmatpush.msra.mxu0 %v458
  %538 = vmatpush.msra.mxu0 %v456
  %539 = vmatpush.msra.mxu0 %v454
  %540 = vmatmul.f32.gmra.mxu0 %v148
  %v541 = vpop.f32.mrf.mxu0
  %v542 = vadd.f32 %v520, %v541
  %543 = vdwg.mxu0
  %544 = vmatpush.msra.mxu0 %v516
  %545 = vmatpush.msra.mxu0 %v514
  %546 = vmatpush.msra.mxu0 %v512
  %547 = vmatpush.msra.mxu0 %v510
  %548 = vmatpush.msra.mxu0 %v508
  %549 = vmatpush.msra.mxu0 %v506
  %550 = vmatpush.msra.mxu0 %v504
  %551 = vmatpush.msra.mxu0 %v502
  %552 = vmatpush.msra.mxu0 %v500
  %553 = vmatpush.msra.mxu0 %v498
  %554 = vmatpush.msra.mxu0 %v496
  %555 = vmatpush.msra.mxu0 %v494
  %556 = vmatpush.msra.mxu0 %v492
  %557 = vmatpush.msra.mxu0 %v490
  %558 = vmatpush.msra.mxu0 %v488
  %559 = vmatpush.msra.mxu0 %v486
  %560 = vmatmul.f32.gmra.mxu0 %v149
  %v561 = vpop.f32.mrf.mxu0
  %v562 = vadd.f32 %v542, %v561
  %563 = vdwg.mxu0
  %564 = vmatpush.msra.mxu0 %v485
  %565 = vmatpush.msra.mxu0 %v483
  %566 = vmatpush.msra.mxu0 %v481
  %567 = vmatpush.msra.mxu0 %v479
  %568 = vmatpush.msra.mxu0 %v477
  %569 = vmatpush.msra.mxu0 %v475
  %570 = vmatpush.msra.mxu0 %v473
  %571 = vmatpush.msra.mxu0 %v471
  %572 = vmatpush.msra.mxu0 %v469
  %573 = vmatpush.msra.mxu0 %v467
  %574 = vmatpush.msra.mxu0 %v465
  %575 = vmatpush.msra.mxu0 %v463
  %576 = vmatpush.msra.mxu0 %v461
  %577 = vmatpush.msra.mxu0 %v459
  %578 = vmatpush.msra.mxu0 %v457
  %579 = vmatpush.msra.mxu0 %v455
  %580 = vmatmul.f32.gmra.mxu0 %v148
  %v581 = vpop.f32.mrf.mxu0
  %v582 = vadd.f32 %v521, %v581
  %583 = vdwg.mxu0
  %584 = vmatpush.msra.mxu0 %v517
  %585 = vmatpush.msra.mxu0 %v515
  %586 = vmatpush.msra.mxu0 %v513
  %587 = vmatpush.msra.mxu0 %v511
  %588 = vmatpush.msra.mxu0 %v509
  %589 = vmatpush.msra.mxu0 %v507
  %590 = vmatpush.msra.mxu0 %v505
  %591 = vmatpush.msra.mxu0 %v503
  %592 = vmatpush.msra.mxu0 %v501
  %593 = vmatpush.msra.mxu0 %v499
  %594 = vmatpush.msra.mxu0 %v497
  %595 = vmatpush.msra.mxu0 %v495
  %596 = vmatpush.msra.mxu0 %v493
  %597 = vmatpush.msra.mxu0 %v491
  %598 = vmatpush.msra.mxu0 %v489
  %599 = vmatpush.msra.mxu0 %v487
  %600 = vmatmul.f32.gmra.mxu0 %v149
  %v601 = vpop.f32.mrf.mxu0
  %v602 = vadd.f32 %v582, %v601
  %603 = vdwg.mxu0
  %v604 = vmax.f32 %v562, 0.0
  %v605 = vmax.f32 %v602, 0.0
  %v606 = vld [vmem:[%s9] sm:$0xff]
  %v607 = vld [vmem:[%s9 + $0x8] sm:$0xff]
  %v608 = vld [vmem:[%s9 + $0x10] sm:$0xff]
  %v609 = vld [vmem:[%s9 + $0x18] sm:$0xff]
  %v610 = vld [vmem:[%s9 + $0x20] sm:$0xff]
  %v611 = vld [vmem:[%s9 + $0x28] sm:$0xff]
  %v612 = vld [vmem:[%s9 + $0x30] sm:$0xff]
  %v613 = vld [vmem:[%s9 + $0x38] sm:$0xff]
  %v614 = vld [vmem:[%s9 + $0x40] sm:$0xff]
  %v615 = vld [vmem:[%s9 + $0x48] sm:$0xff]
  %v616 = vld [vmem:[%s9 + $0x50] sm:$0xff]
  %v617 = vld [vmem:[%s9 + $0x58] sm:$0xff]
  %v618 = vld [vmem:[%s9 + $0x60] sm:$0xff]
  %v619 = vld [vmem:[%s9 + $0x68] sm:$0xff]
  %v620 = vld [vmem:[%s9 + $0x70] sm:$0xff]
  %v621 = vld [vmem:[%s9 + $0x78] sm:$0xff]
  %v622 = vld [vmem:[%s9 + $0x80] sm:$0xff]
  %v623 = vld [vmem:[%s9 + $0x88] sm:$0xff]
  %v624 = vld [vmem:[%s9 + $0x90] sm:$0xff]
  %v625 = vld [vmem:[%s9 + $0x98] sm:$0xff]
  %v626 = vld [vmem:[%s9 + $0xa0] sm:$0xff]
  %v627 = vld [vmem:[%s9 + $0xa8] sm:$0xff]
  %v628 = vld [vmem:[%s9 + $0xb0] sm:$0xff]
  %v629 = vld [vmem:[%s9 + $0xb8] sm:$0xff]
  %v630 = vld [vmem:[%s9 + $0xc0] sm:$0xff]
  %v631 = vld [vmem:[%s9 + $0xc8] sm:$0xff]
  %v632 = vld [vmem:[%s9 + $0xd0] sm:$0xff]
  %v633 = vld [vmem:[%s9 + $0xd8] sm:$0xff]
  %v634 = vld [vmem:[%s9 + $0xe0] sm:$0xff]
  %v635 = vld [vmem:[%s9 + $0xe8] sm:$0xff]
  %v636 = vld [vmem:[%s9 + $0xf0] sm:$0xff]
  %v637 = vld [vmem:[%s9 + $0xf8] sm:$0xff]
  %v638 = vld [vmem:[%s9 + $0x100] sm:$0xff]
  %v639 = vld [vmem:[%s9 + $0x108] sm:$0xff]
  %v640 = vld [vmem:[%s9 + $0x110] sm:$0xff]
  %v641 = vld [vmem:[%s9 + $0x118] sm:$0xff]
  %v642 = vld [vmem:[%s9 + $0x120] sm:$0xff]
  %v643 = vld [vmem:[%s9 + $0x128] sm:$0xff]
  %v644 = vld [vmem:[%s9 + $0x130] sm:$0xff]
  %v645 = vld [vmem:[%s9 + $0x138] sm:$0xff]
  %v646 = vld [vmem:[%s9 + $0x140] sm:$0xff]
  %v647 = vld [vmem:[%s9 + $0x148] sm:$0xff]
  %v648 = vld [vmem:[%s9 + $0x150] sm:$0xff]
  %v649 = vld [vmem:[%s9 + $0x158] sm:$0xff]
  %v650 = vld [vmem:[%s9 + $0x160] sm:$0xff]
  %v651 = vld [vmem:[%s9 + $0x168] sm:$0xff]
  %v652 = vld [vmem:[%s9 + $0x170] sm:$0xff]
  %v653 = vld [vmem:[%s9 + $0x178] sm:$0xff]
  %v654 = vld [vmem:[%s9 + $0x180] sm:$0xff]
  %v655 = vld [vmem:[%s9 + $0x188] sm:$0xff]
  %v656 = vld [vmem:[%s9 + $0x190] sm:$0xff]
  %v657 = vld [vmem:[%s9 + $0x198] sm:$0xff]
  %v658 = vld [vmem:[%s9 + $0x1a0] sm:$0xff]
  %v659 = vld [vmem:[%s9 + $0x1a8] sm:$0xff]
  %v660 = vld [vmem:[%s9 + $0x1b0] sm:$0xff]
  %v661 = vld [vmem:[%s9 + $0x1b8] sm:$0xff]
  %v662 = vld [vmem:[%s9 + $0x1c0] sm:$0xff]
  %v663 = vld [vmem:[%s9 + $0x1c8] sm:$0xff]
  %v664 = vld [vmem:[%s9 + $0x1d0] sm:$0xff]
  %v665 = vld [vmem:[%s9 + $0x1d8] sm:$0xff]
  %v666 = vld [vmem:[%s9 + $0x1e0] sm:$0xff]
  %v667 = vld [vmem:[%s9 + $0x1e8] sm:$0xff]
  %v668 = vld [vmem:[%s9 + $0x1f0] sm:$0xff]
  %v669 = vld [vmem:[%s9 + $0x1f8] sm:$0xff]
  %v670 = vld [vmem:[%s10] sm:$0x3]
  %v672 = vperm.slane %v670, 0
  %v673 = vperm.slane %v670, 1
  %676 = vmatpush.msra.mxu0 %v636
  %677 = vmatpush.msra.mxu0 %v634
  %678 = vmatpush.msra.mxu0 %v632
  %679 = vmatpush.msra.mxu0 %v630
  %680 = vmatpush.msra.mxu0 %v628
  %681 = vmatpush.msra.mxu0 %v626
  %682 = vmatpush.msra.mxu0 %v624
  %683 = vmatpush.msra.mxu0 %v622
  %684 = vmatpush.msra.mxu0 %v620
  %685 = vmatpush.msra.mxu0 %v618
  %686 = vmatpush.msra.mxu0 %v616
  %687 = vmatpush.msra.mxu0 %v614
  %688 = vmatpush.msra.mxu0 %v612
  %689 = vmatpush.msra.mxu0 %v610
  %690 = vmatpush.msra.mxu0 %v608
  %691 = vmatpush.msra.mxu0 %v606
  %692 = vmatmul.f32.gmra.mxu0 %v604
  %v693 = vpop.f32.mrf.mxu0
  %v694 = vadd.f32 %v672, %v693
  %695 = vdwg.mxu0
  %696 = vmatpush.msra.mxu0 %v668
  %697 = vmatpush.msra.mxu0 %v666
  %698 = vmatpush.msra.mxu0 %v664
  %699 = vmatpush.msra.mxu0 %v662
  %700 = vmatpush.msra.mxu0 %v660
  %701 = vmatpush.msra.mxu0 %v658
  %702 = vmatpush.msra.mxu0 %v656
  %703 = vmatpush.msra.mxu0 %v654
  %704 = vmatpush.msra.mxu0 %v652
  %705 = vmatpush.msra.mxu0 %v650
  %706 = vmatpush.msra.mxu0 %v648
  %707 = vmatpush.msra.mxu0 %v646
  %708 = vmatpush.msra.mxu0 %v644
  %709 = vmatpush.msra.mxu0 %v642
  %710 = vmatpush.msra.mxu0 %v640
  %711 = vmatpush.msra.mxu0 %v638
  %712 = vmatmul.f32.gmra.mxu0 %v605
  %v713 = vpop.f32.mrf.mxu0
  %v714 = vadd.f32 %v694, %v713
  %715 = vdwg.mxu0
  %716 = vmatpush.msra.mxu0 %v637
  %717 = vmatpush.msra.mxu0 %v635
  %718 = vmatpush.msra.mxu0 %v633
  %719 = vmatpush.msra.mxu0 %v631
  %720 = vmatpush.msra.mxu0 %v629
  %721 = vmatpush.msra.mxu0 %v627
  %722 = vmatpush.msra.mxu0 %v625
  %723 = vmatpush.msra.mxu0 %v623
  %724 = vmatpush.msra.mxu0 %v621
  %725 = vmatpush.msra.mxu0 %v619
  %726 = vmatpush.msra.mxu0 %v617
  %727 = vmatpush.msra.mxu0 %v615
  %728 = vmatpush.msra.mxu0 %v613
  %729 = vmatpush.msra.mxu0 %v611
  %730 = vmatpush.msra.mxu0 %v609
  %731 = vmatpush.msra.mxu0 %v607
  %732 = vmatmul.f32.gmra.mxu0 %v604
  %v733 = vpop.f32.mrf.mxu0
  %v734 = vadd.f32 %v673, %v733
  %735 = vdwg.mxu0
  %736 = vmatpush.msra.mxu0 %v669
  %737 = vmatpush.msra.mxu0 %v667
  %738 = vmatpush.msra.mxu0 %v665
  %739 = vmatpush.msra.mxu0 %v663
  %740 = vmatpush.msra.mxu0 %v661
  %741 = vmatpush.msra.mxu0 %v659
  %742 = vmatpush.msra.mxu0 %v657
  %743 = vmatpush.msra.mxu0 %v655
  %744 = vmatpush.msra.mxu0 %v653
  %745 = vmatpush.msra.mxu0 %v651
  %746 = vmatpush.msra.mxu0 %v649
  %747 = vmatpush.msra.mxu0 %v647
  %748 = vmatpush.msra.mxu0 %v645
  %749 = vmatpush.msra.mxu0 %v643
  %750 = vmatpush.msra.mxu0 %v641
  %751 = vmatpush.msra.mxu0 %v639
  %752 = vmatmul.f32.gmra.mxu0 %v605
  %v753 = vpop.f32.mrf.mxu0
  %v754 = vadd.f32 %v734, %v753
  %755 = vdwg.mxu0
  %v756 = vmax.f32 %v714, 0.0
  %v757 = vmax.f32 %v754, 0.0
  %v758 = vld [vmem:[%s11] sm:$0xff]
  %v759 = vld [vmem:[%s11 + $0x8] sm:$0xff]
  %v760 = vld [vmem:[%s11 + $0x10] sm:$0xff]
  %v761 = vld [vmem:[%s11 + $0x18] sm:$0xff]
  %v762 = vld [vmem:[%s11 + $0x20] sm:$0xff]
  %v763 = vld [vmem:[%s11 + $0x28] sm:$0xff]
  %v764 = vld [vmem:[%s11 + $0x30] sm:$0xff]
  %v765 = vld [vmem:[%s11 + $0x38] sm:$0xff]
  %v766 = vld [vmem:[%s11 + $0x40] sm:$0xff]
  %v767 = vld [vmem:[%s11 + $0x48] sm:$0xff]
  %v768 = vld [vmem:[%s11 + $0x50] sm:$0xff]
  %v769 = vld [vmem:[%s11 + $0x58] sm:$0xff]
  %v770 = vld [vmem:[%s11 + $0x60] sm:$0xff]
  %v771 = vld [vmem:[%s11 + $0x68] sm:$0xff]
  %v772 = vld [vmem:[%s11 + $0x70] sm:$0xff]
  %v773 = vld [vmem:[%s11 + $0x78] sm:$0xff]
  %v774 = vld [vmem:[%s11 + $0x80] sm:$0xff]
  %v775 = vld [vmem:[%s11 + $0x88] sm:$0xff]
  %v776 = vld [vmem:[%s11 + $0x90] sm:$0xff]
  %v777 = vld [vmem:[%s11 + $0x98] sm:$0xff]
  %v778 = vld [vmem:[%s11 + $0xa0] sm:$0xff]
  %v779 = vld [vmem:[%s11 + $0xa8] sm:$0xff]
  %v780 = vld [vmem:[%s11 + $0xb0] sm:$0xff]
  %v781 = vld [vmem:[%s11 + $0xb8] sm:$0xff]
  %v782 = vld [vmem:[%s11 + $0xc0] sm:$0xff]
  %v783 = vld [vmem:[%s11 + $0xc8] sm:$0xff]
  %v784 = vld [vmem:[%s11 + $0xd0] sm:$0xff]
  %v785 = vld [vmem:[%s11 + $0xd8] sm:$0xff]
  %v786 = vld [vmem:[%s11 + $0xe0] sm:$0xff]
  %v787 = vld [vmem:[%s11 + $0xe8] sm:$0xff]
  %v788 = vld [vmem:[%s11 + $0xf0] sm:$0xff]
  %v789 = vld [vmem:[%s11 + $0xf8] sm:$0xff]
  %v790 = vld [vmem:[%s12] sm:$0xff]
  %v791 = vld [vmem:[%s12 + $0x8] sm:$0xff]
  %v792 = vld [vmem:[%s12 + $0x10] sm:$0xff]
  %v793 = vld [vmem:[%s12 + $0x18] sm:$0xff]
  %v794 = vld [vmem:[%s12 + $0x20] sm:$0xff]
  %v795 = vld [vmem:[%s12 + $0x28] sm:$0xff]
  %v796 = vld [vmem:[%s12 + $0x30] sm:$0xff]
  %v797 = vld [vmem:[%s12 + $0x38] sm:$0xff]
  %v798 = vld [vmem:[%s12 + $0x40] sm:$0xff]
  %v799 = vld [vmem:[%s12 + $0x48] sm:$0xff]
  %v800 = vld [vmem:[%s12 + $0x50] sm:$0xff]
  %v801 = vld [vmem:[%s12 + $0x58] sm:$0xff]
  %v802 = vld [vmem:[%s12 + $0x60] sm:$0xff]
  %v803 = vld [vmem:[%s12 + $0x68] sm:$0xff]
  %v804 = vld [vmem:[%s12 + $0x70] sm:$0xff]
  %v805 = vld [vmem:[%s12 + $0x78] sm:$0xff]
  %v806 = vld [vmem:[%s12 + $0x80] sm:$0xff]
  %v807 = vld [vmem:[%s12 + $0x88] sm:$0xff]
  %v808 = vld [vmem:[%s12 + $0x90] sm:$0xff]
  %v809 = vld [vmem:[%s12 + $0x98] sm:$0xff]
  %v810 = vld [vmem:[%s12 + $0xa0] sm:$0xff]
  %v811 = vld [vmem:[%s12 + $0xa8] sm:$0xff]
  %v812 = vld [vmem:[%s12 + $0xb0] sm:$0xff]
  %v813 = vld [vmem:[%s12 + $0xb8] sm:$0xff]
  %v814 = vld [vmem:[%s12 + $0xc0] sm:$0xff]
  %v815 = vld [vmem:[%s12 + $0xc8] sm:$0xff]
  %v816 = vld [vmem:[%s12 + $0xd0] sm:$0xff]
  %v817 = vld [vmem:[%s12 + $0xd8] sm:$0xff]
  %v818 = vld [vmem:[%s12 + $0xe0] sm:$0xff]
  %v819 = vld [vmem:[%s12 + $0xe8] sm:$0xff]
  %v820 = vld [vmem:[%s12 + $0xf0] sm:$0xff]
  %v821 = vld [vmem:[%s12 + $0xf8] sm:$0xff]
  %822 = vmatpush.msra.mxu0 %v805
  %823 = vmatpush.msra.mxu0 %v804
  %824 = vmatpush.msra.mxu0 %v803
  %825 = vmatpush.msra.mxu0 %v802
  %826 = vmatpush.msra.mxu0 %v801
  %827 = vmatpush.msra.mxu0 %v800
  %828 = vmatpush.msra.mxu0 %v799
  %829 = vmatpush.msra.mxu0 %v798
  %830 = vmatpush.msra.mxu0 %v797
  %831 = vmatpush.msra.mxu0 %v796
  %832 = vmatpush.msra.mxu0 %v795
  %833 = vmatpush.msra.mxu0 %v794
  %834 = vmatpush.msra.mxu0 %v793
  %835 = vmatpush.msra.mxu0 %v792
  %836 = vmatpush.msra.mxu0 %v791
  %837 = vmatpush.msra.mxu0 %v790
  %838 = vmatmul.f32.gmra.mxu0 %v756
  %v839 = vpop.f32.mrf.mxu0
  %v840 = vadd.f32 0.0, %v839
  %841 = vdwg.mxu0
  %842 = vmatpush.msra.mxu0 %v821
  %843 = vmatpush.msra.mxu0 %v820
  %844 = vmatpush.msra.mxu0 %v819
  %845 = vmatpush.msra.mxu0 %v818
  %846 = vmatpush.msra.mxu0 %v817
  %847 = vmatpush.msra.mxu0 %v816
  %848 = vmatpush.msra.mxu0 %v815
  %849 = vmatpush.msra.mxu0 %v814
  %850 = vmatpush.msra.mxu0 %v813
  %851 = vmatpush.msra.mxu0 %v812
  %852 = vmatpush.msra.mxu0 %v811
  %853 = vmatpush.msra.mxu0 %v810
  %854 = vmatpush.msra.mxu0 %v809
  %855 = vmatpush.msra.mxu0 %v808
  %856 = vmatpush.msra.mxu0 %v807
  %857 = vmatpush.msra.mxu0 %v806
  %858 = vmatmul.f32.gmra.mxu0 %v757
  %v859 = vpop.f32.mrf.mxu0
  %v860 = vadd.f32 %v840, %v859
  %861 = vdwg.mxu0
  %862 = vmatpush.msra.mxu0 %v773
  %863 = vmatpush.msra.mxu0 %v772
  %864 = vmatpush.msra.mxu0 %v771
  %865 = vmatpush.msra.mxu0 %v770
  %866 = vmatpush.msra.mxu0 %v769
  %867 = vmatpush.msra.mxu0 %v768
  %868 = vmatpush.msra.mxu0 %v767
  %869 = vmatpush.msra.mxu0 %v766
  %870 = vmatpush.msra.mxu0 %v765
  %871 = vmatpush.msra.mxu0 %v764
  %872 = vmatpush.msra.mxu0 %v763
  %873 = vmatpush.msra.mxu0 %v762
  %874 = vmatpush.msra.mxu0 %v761
  %875 = vmatpush.msra.mxu0 %v760
  %876 = vmatpush.msra.mxu0 %v759
  %877 = vmatpush.msra.mxu0 %v758
  %878 = vmatmul.f32.gmra.mxu0 %v452
  %v879 = vpop.f32.mrf.mxu0
  %v880 = vadd.f32 %v860, %v879
  %881 = vdwg.mxu0
  %882 = vmatpush.msra.mxu0 %v789
  %883 = vmatpush.msra.mxu0 %v788
  %884 = vmatpush.msra.mxu0 %v787
  %885 = vmatpush.msra.mxu0 %v786
  %886 = vmatpush.msra.mxu0 %v785
  %887 = vmatpush.msra.mxu0 %v784
  %888 = vmatpush.msra.mxu0 %v783
  %889 = vmatpush.msra.mxu0 %v782
  %890 = vmatpush.msra.mxu0 %v781
  %891 = vmatpush.msra.mxu0 %v780
  %892 = vmatpush.msra.mxu0 %v779
  %893 = vmatpush.msra.mxu0 %v778
  %894 = vmatpush.msra.mxu0 %v777
  %895 = vmatpush.msra.mxu0 %v776
  %896 = vmatpush.msra.mxu0 %v775
  %897 = vmatpush.msra.mxu0 %v774
  %898 = vmatmul.f32.gmra.mxu0 %v453
  %v899 = vpop.f32.mrf.mxu0
  %v900 = vadd.f32 %v880, %v899
  %901 = vdwg.mxu0
  %v902 = vld [vmem:[%s13] sm:$0x1]
  %v904 = vperm.slane %v902, 0
  %v906 = vadd.f32 %v900, %v904
  %907 = vst [vmem:[%s14] sm:$0xff] %v906
  // Predicated region
  $region58: #{mlp_net_forward.1} parent=0 // pred_check
    _
  $region59: #{mlp_net_forward.1} parent=0 // pred_check_branch
    %909 = sbr.rel (0) target = $region61
  $region60: #{mlp_net_forward.1} parent=0 // pred_region
    _
  $region61: #{mlp_net_forward.1} parent=0 // pred_fallthru
    _
  // Predicated region
  $region62: #{mlp_net_forward.1} parent=0 // pred_check
    _
  $region63: #{mlp_net_forward.1} parent=0 // pred_check_branch
    %911 = sbr.rel (0) target = $region65
  $region64: #{mlp_net_forward.1} parent=0 // pred_region
    _
  $region65: #{mlp_net_forward.1} parent=0 // pred_fallthru
    _

</llo_original>
